<compile_context>
chip_gen: v6e
topology: v6e:2x2x1
jax: 0.10.0
libtpu: 0.0.40
codegen_flags: <defaults>
</compile_context>

<pallas_src>
import jax
import jax.numpy as jnp
from jax.experimental import pallas as pl
from jax.experimental.pallas import tpu as pltpu


def _lupi_encoder_kernel(x_ref, pi_ref, w1x_ref, w1p_ref, b1_ref,
                         w2_ref, b2_ref, w3_ref, b3_ref, out_ref):
    x = x_ref[...]
    pi = pi_ref[...]

    # Layer 1:  relu(cat(x, pi) @ W1 + b1), with W1 split row-wise so the
    # concatenation is never materialized.
    h1 = jnp.dot(x, w1x_ref[...], preferred_element_type=jnp.float32)
    h1 = h1 + jnp.dot(pi, w1p_ref[...], preferred_element_type=jnp.float32)
    h1 = jnp.maximum(h1 + b1_ref[...], 0.0)

    # Layer 2:  relu(h1 @ W2 + b2)
    h2 = jnp.dot(h1, w2_ref[...], preferred_element_type=jnp.float32)
    h2 = jnp.maximum(h2 + b2_ref[...], 0.0)

    # Layer 3:  h2 @ W3_padded + b3_padded   (lane-dense, unmasked stores)
    out = jnp.dot(h2, w3_ref[...], preferred_element_type=jnp.float32)
    out_ref[...] = (out + b3_ref[...]).astype(out_ref.dtype)


def lupi_encoder(x, pi, params, *, block_batch=128):
    """x: (B, t_dim), pi: (B, pi_dim) float32. Returns (B, r_dim) float32."""
    w1, b1 = params["w1"], params["b1"]   # (t_dim + pi_dim, h_dim), (1, h_dim)
    w2, b2 = params["w2"], params["b2"]   # (h_dim, h_dim),          (1, h_dim)
    w3, b3 = params["w3"], params["b3"]   # (h_dim, r_dim),          (1, r_dim)

    batch, t_dim = x.shape
    pi_dim = pi.shape[1]
    h_dim = w1.shape[1]
    r_dim = w3.shape[1]

    # Split W1 row-wise (equivalent to concatenating the inputs).
    w1x = w1[:t_dim]
    w1p = w1[t_dim:]

    # Pad the output projection to a lane-dense width (multiple of 128) so the
    # kernel's stores are full-lane vst, not masked partial stores.
    r_pad = pl.cdiv(r_dim, 128) * 128
    w3p = jnp.zeros((h_dim, r_pad), w3.dtype).at[:, :r_dim].set(w3)
    b3p = jnp.zeros((1, r_pad), b3.dtype).at[:, :r_dim].set(b3)

    # Batch tile: full batch if small, else 128-row tiles (sublane-aligned).
    tm = batch if batch <= block_batch else block_batch
    grid = (pl.cdiv(batch, tm),)

    resident = lambda shape: pl.BlockSpec(shape, lambda i: (0, 0))

    flops = 2 * batch * (t_dim * h_dim + pi_dim * h_dim
                         + h_dim * h_dim + h_dim * r_pad)
    bytes_accessed = 4 * (x.size + pi.size + w1x.size + w1p.size + b1.size
                          + w2.size + b2.size + w3p.size + b3p.size
                          + batch * r_pad)

    out_padded = pl.pallas_call(
        _lupi_encoder_kernel,
        out_shape=jax.ShapeDtypeStruct((batch, r_pad), jnp.float32),
        grid=grid,
        in_specs=[
            pl.BlockSpec((tm, t_dim), lambda i: (i, 0)),    # x
            pl.BlockSpec((tm, pi_dim), lambda i: (i, 0)),   # pi
            resident((t_dim, h_dim)),                        # W1x
            resident((pi_dim, h_dim)),                       # W1pi
            resident((1, h_dim)),                            # b1
            resident((h_dim, h_dim)),                        # W2
            resident((1, h_dim)),                            # b2
            resident((h_dim, r_pad)),                        # W3 (padded)
            resident((1, r_pad)),                            # b3 (padded)
        ],
        out_specs=pl.BlockSpec((tm, r_pad), lambda i: (i, 0)),
        compiler_params=pltpu.CompilerParams(
            dimension_semantics=("parallel",)),
        cost_estimate=pl.CostEstimate(
            flops=flops, transcendentals=0, bytes_accessed=bytes_accessed),
    )(x, pi, w1x, w1p, b1, w2, b2, w3p, b3p)

    return out_padded[:, :r_dim]


def init_params(key, t_dim, pi_dim, h_dim, r_dim):
    """Deterministic synthetic init (PyTorch nn.Linear-like uniform)."""
    ks = jax.random.split(key, 6)

    def uniform(k, shape, fan_in):
        bound = 1.0 / jnp.sqrt(fan_in)
        return jax.random.uniform(k, shape, jnp.float32, -bound, bound)

    in_dim = t_dim + pi_dim
    return {
        "w1": uniform(ks[0], (in_dim, h_dim), in_dim),
        "b1": uniform(ks[1], (1, h_dim), in_dim),
        "w2": uniform(ks[2], (h_dim, h_dim), h_dim),
        "b2": uniform(ks[3], (1, h_dim), h_dim),
        "w3": uniform(ks[4], (h_dim, r_dim), h_dim),
        "b3": uniform(ks[5], (1, r_dim), h_dim),
    }


if __name__ == "__main__":
    batch, t_dim, pi_dim, h_dim, r_dim = 16, 4, 8, 32, 16

    key = jax.random.PRNGKey(0)
    k_x, k_pi, k_p = jax.random.split(key, 3)
    x = jax.random.normal(k_x, (batch, t_dim), jnp.float32)
    pi = jax.random.normal(k_pi, (batch, pi_dim), jnp.float32)
    params = init_params(k_p, t_dim, pi_dim, h_dim, r_dim)

    # block_batch=8 so the demo actually exercises the batch grid (2 steps).
    out = lupi_encoder(x, pi, params, block_batch=8)
    jax.block_until_ready(out)

    # Reference check in plain JAX (same math as the PyTorch forward).
    inp = jnp.concatenate([x, pi], axis=1)
    h1_ref = jnp.maximum(inp @ params["w1"] + params["b1"], 0.0)
    h2_ref = jnp.maximum(h1_ref @ params["w2"] + params["b2"], 0.0)
    out_ref = h2_ref @ params["w3"] + params["b3"]

    assert out.shape == (batch, r_dim)
    assert jnp.allclose(out, out_ref, atol=1e-5), "LupiEncoder output mismatch"

    print("KERNEL_OK")
</pallas_src>

<mosaic_0001>
module attributes {stable_mosaic.version = 11 : i64} {
  func.func @_lupi_encoder_kernel(%arg0: i32, %arg1: memref<8x4xf32, #tpu.memory_space<vmem>>, %arg2: memref<8x8xf32, #tpu.memory_space<vmem>>, %arg3: memref<4x32xf32, #tpu.memory_space<vmem>>, %arg4: memref<8x32xf32, #tpu.memory_space<vmem>>, %arg5: memref<1x32xf32, #tpu.memory_space<vmem>>, %arg6: memref<32x32xf32, #tpu.memory_space<vmem>>, %arg7: memref<1x32xf32, #tpu.memory_space<vmem>>, %arg8: memref<32x128xf32, #tpu.memory_space<vmem>>, %arg9: memref<1x128xf32, #tpu.memory_space<vmem>>, %arg10: memref<8x128xf32, #tpu.memory_space<vmem>>) attributes {dimension_semantics = [#tpu.dimension_semantics<parallel>], iteration_bounds = array<i64: 2>, scalar_prefetch = 0 : i64, scratch_operands = 0 : i64, tpu.core_type = #tpu.core_type<tc>, window_params = [{transform_indices = @transform_0, window_bounds = array<i64: 8, 4>}, {transform_indices = @transform_1, window_bounds = array<i64: 8, 8>}, {pipeline_mode = #tpu.pipeline_mode<synchronous>, transform_indices = @transform_2, window_bounds = array<i64: 4, 32>}, {pipeline_mode = #tpu.pipeline_mode<synchronous>, transform_indices = @transform_3, window_bounds = array<i64: 8, 32>}, {pipeline_mode = #tpu.pipeline_mode<synchronous>, transform_indices = @transform_4, window_bounds = array<i64: 1, 32>}, {pipeline_mode = #tpu.pipeline_mode<synchronous>, transform_indices = @transform_5, window_bounds = array<i64: 32, 32>}, {pipeline_mode = #tpu.pipeline_mode<synchronous>, transform_indices = @transform_6, window_bounds = array<i64: 1, 32>}, {pipeline_mode = #tpu.pipeline_mode<synchronous>, transform_indices = @transform_7, window_bounds = array<i64: 32, 128>}, {pipeline_mode = #tpu.pipeline_mode<synchronous>, transform_indices = @transform_8, window_bounds = array<i64: 1, 128>}, {transform_indices = @transform_9, window_bounds = array<i64: 8, 128>}]} {
    %c0 = arith.constant 0 : index
    %c0_0 = arith.constant 0 : index
    %0 = vector.load %arg1[%c0, %c0_0] : memref<8x4xf32, #tpu.memory_space<vmem>>, vector<8x4xf32>
    %c0_1 = arith.constant 0 : index
    %c0_2 = arith.constant 0 : index
    %1 = vector.load %arg2[%c0_1, %c0_2] : memref<8x8xf32, #tpu.memory_space<vmem>>, vector<8x8xf32>
    %c0_3 = arith.constant 0 : index
    %c0_4 = arith.constant 0 : index
    %2 = vector.load %arg3[%c0_3, %c0_4] : memref<4x32xf32, #tpu.memory_space<vmem>>, vector<4x32xf32>
    %cst = arith.constant dense<0.000000e+00> : vector<8x32xf32>
    %3 = tpu.matmul %0, %2, %cst {dimension_numbers = #tpu.dot_dimension_numbers<[1], [0], [0], [1], [0, 0, 1, 1], [], []>} : vector<8x4xf32>, vector<4x32xf32>, vector<8x32xf32> -> vector<8x32xf32>
    %c0_5 = arith.constant 0 : index
    %c0_6 = arith.constant 0 : index
    %4 = vector.load %arg4[%c0_5, %c0_6] : memref<8x32xf32, #tpu.memory_space<vmem>>, vector<8x32xf32>
    %cst_7 = arith.constant dense<0.000000e+00> : vector<8x32xf32>
    %5 = tpu.matmul %1, %4, %cst_7 {dimension_numbers = #tpu.dot_dimension_numbers<[1], [0], [0], [1], [0, 0, 1, 1], [], []>} : vector<8x8xf32>, vector<8x32xf32>, vector<8x32xf32> -> vector<8x32xf32>
    %6 = arith.addf %3, %5 : vector<8x32xf32>
    %c0_8 = arith.constant 0 : index
    %c0_9 = arith.constant 0 : index
    %7 = vector.load %arg5[%c0_8, %c0_9] : memref<1x32xf32, #tpu.memory_space<vmem>>, vector<1x32xf32>
    %8 = vector.broadcast %7 : vector<1x32xf32> to vector<8x32xf32>
    %9 = arith.addf %6, %8 : vector<8x32xf32>
    %cst_10 = arith.constant 0.000000e+00 : f32
    %10 = vector.broadcast %cst_10 : f32 to vector<8x32xf32>
    %11 = arith.maximumf %9, %10 : vector<8x32xf32>
    %c0_11 = arith.constant 0 : index
    %c0_12 = arith.constant 0 : index
    %12 = vector.load %arg6[%c0_11, %c0_12] : memref<32x32xf32, #tpu.memory_space<vmem>>, vector<32x32xf32>
    %cst_13 = arith.constant dense<0.000000e+00> : vector<8x32xf32>
    %13 = tpu.matmul %11, %12, %cst_13 {dimension_numbers = #tpu.dot_dimension_numbers<[1], [0], [0], [1], [0, 0, 1, 1], [], []>} : vector<8x32xf32>, vector<32x32xf32>, vector<8x32xf32> -> vector<8x32xf32>
    %c0_14 = arith.constant 0 : index
    %c0_15 = arith.constant 0 : index
    %14 = vector.load %arg7[%c0_14, %c0_15] : memref<1x32xf32, #tpu.memory_space<vmem>>, vector<1x32xf32>
    %15 = vector.broadcast %14 : vector<1x32xf32> to vector<8x32xf32>
    %16 = arith.addf %13, %15 : vector<8x32xf32>
    %cst_16 = arith.constant 0.000000e+00 : f32
    %17 = vector.broadcast %cst_16 : f32 to vector<8x32xf32>
    %18 = arith.maximumf %16, %17 : vector<8x32xf32>
    %c0_17 = arith.constant 0 : index
    %c0_18 = arith.constant 0 : index
    %19 = vector.load %arg8[%c0_17, %c0_18] : memref<32x128xf32, #tpu.memory_space<vmem>>, vector<32x128xf32>
    %cst_19 = arith.constant dense<0.000000e+00> : vector<8x128xf32>
    %20 = tpu.matmul %18, %19, %cst_19 {dimension_numbers = #tpu.dot_dimension_numbers<[1], [0], [0], [1], [0, 0, 1, 1], [], []>} : vector<8x32xf32>, vector<32x128xf32>, vector<8x128xf32> -> vector<8x128xf32>
    %c0_20 = arith.constant 0 : index
    %c0_21 = arith.constant 0 : index
    %21 = vector.load %arg9[%c0_20, %c0_21] : memref<1x128xf32, #tpu.memory_space<vmem>>, vector<1x128xf32>
    %22 = vector.broadcast %21 : vector<1x128xf32> to vector<8x128xf32>
    %23 = arith.addf %20, %22 : vector<8x128xf32>
    %c0_22 = arith.constant 0 : index
    %c0_23 = arith.constant 0 : index
    %24 = vector.load %arg10[%c0_22, %c0_23] : memref<8x128xf32, #tpu.memory_space<vmem>>, vector<8x128xf32>
    tpu.vector_store %arg10[%c0_22, %c0_23], %23 {strides = array<i32>} : memref<8x128xf32, #tpu.memory_space<vmem>>, vector<8x128xf32>,
    return
  }
  func.func @transform_0(%arg0: i32) -> (i32, i32) {
    %c0_i32 = arith.constant 0 : i32
    %c0_i32_0 = arith.constant 0 : i32
    return %arg0, %c0_i32 : i32, i32
  }
  func.func @transform_1(%arg0: i32) -> (i32, i32) {
    %c0_i32 = arith.constant 0 : i32
    %c0_i32_0 = arith.constant 0 : i32
    return %arg0, %c0_i32 : i32, i32
  }
  func.func @transform_2(%arg0: i32) -> (i32, i32) {
    %c0_i32 = arith.constant 0 : i32
    %c0_i32_0 = arith.constant 0 : i32
    %c0_i32_1 = arith.constant 0 : i32
    return %c0_i32, %c0_i32_0 : i32, i32
  }
  func.func @transform_3(%arg0: i32) -> (i32, i32) {
    %c0_i32 = arith.constant 0 : i32
    %c0_i32_0 = arith.constant 0 : i32
    %c0_i32_1 = arith.constant 0 : i32
    return %c0_i32, %c0_i32_0 : i32, i32
  }
  func.func @transform_4(%arg0: i32) -> (i32, i32) {
    %c0_i32 = arith.constant 0 : i32
    %c0_i32_0 = arith.constant 0 : i32
    %c0_i32_1 = arith.constant 0 : i32
    return %c0_i32, %c0_i32_0 : i32, i32
  }
  func.func @transform_5(%arg0: i32) -> (i32, i32) {
    %c0_i32 = arith.constant 0 : i32
    %c0_i32_0 = arith.constant 0 : i32
    %c0_i32_1 = arith.constant 0 : i32
    return %c0_i32, %c0_i32_0 : i32, i32
  }
  func.func @transform_6(%arg0: i32) -> (i32, i32) {
    %c0_i32 = arith.constant 0 : i32
    %c0_i32_0 = arith.constant 0 : i32
    %c0_i32_1 = arith.constant 0 : i32
    return %c0_i32, %c0_i32_0 : i32, i32
  }
  func.func @transform_7(%arg0: i32) -> (i32, i32) {
    %c0_i32 = arith.constant 0 : i32
    %c0_i32_0 = arith.constant 0 : i32
    %c0_i32_1 = arith.constant 0 : i32
    return %c0_i32, %c0_i32_0 : i32, i32
  }
  func.func @transform_8(%arg0: i32) -> (i32, i32) {
    %c0_i32 = arith.constant 0 : i32
    %c0_i32_0 = arith.constant 0 : i32
    %c0_i32_1 = arith.constant 0 : i32
    return %c0_i32, %c0_i32_0 : i32, i32
  }
  func.func @transform_9(%arg0: i32) -> (i32, i32) {
    %c0_i32 = arith.constant 0 : i32
    %c0_i32_0 = arith.constant 0 : i32
    return %arg0, %c0_i32 : i32, i32
  }
}

</mosaic_0001>

<llo_original>
// kernel: tpu_custom_call.1
$region0: #{tpu_custom_call.1}
  #allocation0 [shape = 'u32[]', space=smem, size = 0x4, offset = 0x4, fixed_abs, tag = 'smem constant byte address 0x4 - core index']
  #allocation1 [shape = 'u32[144,128]{1,0:T(1,128)}', space=vmem, size = 0x12000, scoped, tag = 'internal scratch']
  %s0 = inlined_call_operand.vmem [shape: f32[16,4], index: 0, kind: input, shape index: {}]
  %s1 = inlined_call_operand.vmem [shape: f32[16,8], index: 1, kind: input, shape index: {}]
  %s2 = inlined_call_operand.vmem [shape: f32[4,32], index: 2, kind: input, shape index: {}]
  %s3 = inlined_call_operand.vmem [shape: f32[8,32], index: 3, kind: input, shape index: {}]
  %s4 = inlined_call_operand.vmem [shape: f32[1,32], index: 4, kind: input, shape index: {}]
  %s5 = inlined_call_operand.vmem [shape: f32[32,32], index: 5, kind: input, shape index: {}]
  %s6 = inlined_call_operand.vmem [shape: f32[1,32], index: 6, kind: input, shape index: {}]
  %s7 = inlined_call_operand.hbm [shape: f32[32,128], index: 7, kind: input, shape index: {}]
  %s8 = inlined_call_operand.vmem [shape: f32[1,128], index: 8, kind: input, shape index: {}]
  %s9 = inlined_call_operand.hbm [shape: f32[16,128], index: 9, kind: output, shape index: {}]
  %s10 = sld [smem:[#allocation0]]
  $region73: #{tpu_custom_call.1} parent=0
    _
  %s12 = ssub.s32 1, %s10
  %s13 = scalar_select 0, %s12, %s10
  $region1: #{tpu_custom_call.1} parent=0
    #allocation2 [shape = 'u8[16384]{0}', space=vmem, size = 0x4000, scoped, tag = 'input window, operand 7, single buffered']
    #allocation3 [shape = 's32[2]{0}', space=sflag, size = 0x8, scoped, tag = 'scoped memory for tpu_custom_call.1']
    #allocation4 [shape = 's32[2]{0}', space=sflag, size = 0x8, scoped, tag = 'scoped memory for tpu_custom_call.1']
    #allocation5 [shape = 'u8[8192]{0}', space=vmem, size = 0x2000, scoped, tag = 'output window, operand 0']
    %14 = vsyncpa [#allocation3], 0
    %15 = vsyncpa [#allocation4], 0
    %s16 = scalar_lea.sflag [#allocation4], 1
    %17 = vsyncpa %s16, 0
    loop: start=0, step=1, limit=4
    $region2: #{tpu_custom_call.1} parent=1 // loop_pre_header
      _
    $region3: #{tpu_custom_call.1} parent=1 // loop_header
      %s19 = sphi 0, %s23
      %p20 = scmp.ge.s32.totalorder %s19, 4
      %s29 = sphi 0, %s31
      %s32 = sphi 0, %s29
      %s33 = sphi 0, %s32
      %s49 = sphi 0, %s33
      %s55 = sphi 0, %s57
      %s58 = sphi 0, %s55
      %s59 = sphi 0, %s58
      %s75 = sphi 0, %s59
      %s79 = sphi 0, %s79
      %s81 = sphi 0, %s79
      %s82 = sphi 0, %s81
      %s96 = sphi 0, %s82
      %s100 = sphi 0, %s100
      %s102 = sphi 0, %s100
      %s103 = sphi 0, %s102
      %s117 = sphi 0, %s103
      %s121 = sphi 0, %s121
      %s123 = sphi 0, %s121
      %s124 = sphi 0, %s123
      %s138 = sphi 0, %s124
      %s142 = sphi 0, %s142
      %s144 = sphi 0, %s142
      %s145 = sphi 0, %s144
      %s159 = sphi 0, %s145
      %s163 = sphi 0, %s163
      %s165 = sphi 0, %s163
      %s166 = sphi 0, %s165
      %s180 = sphi 0, %s166
      %s184 = sphi 0, %s184
      %s186 = sphi 0, %s184
      %s187 = sphi 0, %s186
      %s201 = sphi 0, %s187
      %s205 = sphi 0, %s205
      %s207 = sphi 0, %s205
      %s208 = sphi 0, %s207
      %s222 = sphi 0, %s208
      %s228 = sphi 0, %s230
      %s231 = sphi 0, %s228
      %s232 = sphi 0, %s231
      %s248 = sphi 0, %s232
    $region4: #{tpu_custom_call.1} parent=1 // loop_header_branch
      %22 = sbr.rel (%p20) target = $region8
    $region5: #{tpu_custom_call.1} parent=1 // loop_body
      %s24 = ssub.s32 %s19, 1
      %s25 = ssub.s32 %s19, 2
      %s26 = sadd.s32 %s19, 1
      %s27 = ssub.s32 %s19, %s26
      %p28 = scmp.eq.s32.totalorder %s27, 0
      %s30 = sadd.s32 %s29, 1
      %s31 = scalar_select %p28, %s29, %s30
      %p34 = pneg %p28
      %p35 = scmp.eq.s32.totalorder %s19, 1
      %p36 = por %p34, %p35
      %p37 = scmp.ne.s32.totalorder %s29, %s32
      %p38 = scmp.eq.s32.totalorder %s19, 0
      %p39 = por %p37, %p38
      %p40 = scmp.ne.s32.totalorder %s29, %s32
      %p41 = scmp.eq.s32.totalorder %s24, 1
      %p42 = por %p40, %p41
      %p43 = scmp.ne.s32.totalorder %s32, %s33
      %p44 = scmp.eq.s32.totalorder %s24, 0
      %p45 = por %p43, %p44
      %p46 = scmp.ne.s32.totalorder %s32, %s33
      %p47 = scmp.eq.s32.totalorder %s25, 1
      %p48 = por %p46, %p47
      %p50 = scmp.ne.s32.totalorder %s33, %s49
      %p51 = scmp.eq.s32.totalorder %s25, 0
      %p52 = por %p50, %p51
      %s53 = ssub.s32 %s19, %s26
      %p54 = scmp.eq.s32.totalorder %s53, 0
      %s56 = sadd.s32 %s55, 1
      %s57 = scalar_select %p54, %s55, %s56
      %p60 = pneg %p54
      %p61 = scmp.eq.s32.totalorder %s19, 1
      %p62 = por %p60, %p61
      %p63 = scmp.ne.s32.totalorder %s55, %s58
      %p64 = scmp.eq.s32.totalorder %s19, 0
      %p65 = por %p63, %p64
      %p66 = scmp.ne.s32.totalorder %s55, %s58
      %p67 = scmp.eq.s32.totalorder %s24, 1
      %p68 = por %p66, %p67
      %p69 = scmp.ne.s32.totalorder %s58, %s59
      %p70 = scmp.eq.s32.totalorder %s24, 0
      %p71 = por %p69, %p70
      %p72 = scmp.ne.s32.totalorder %s58, %s59
      %p73 = scmp.eq.s32.totalorder %s25, 1
      %p74 = por %p72, %p73
      %p76 = scmp.ne.s32.totalorder %s59, %s75
      %p77 = scmp.eq.s32.totalorder %s25, 0
      %p78 = por %p76, %p77
      %s80 = sadd.s32 %s79, 1
      %p83 = scmp.eq.s32.totalorder %s19, 1
      %p84 = scmp.ne.s32.totalorder %s79, %s81
      %p85 = scmp.eq.s32.totalorder %s19, 0
      %p86 = por %p84, %p85
      %p87 = scmp.ne.s32.totalorder %s79, %s81
      %p88 = scmp.eq.s32.totalorder %s24, 1
      %p89 = por %p87, %p88
      %p90 = scmp.ne.s32.totalorder %s81, %s82
      %p91 = scmp.eq.s32.totalorder %s24, 0
      %p92 = por %p90, %p91
      %p93 = scmp.ne.s32.totalorder %s81, %s82
      %p94 = scmp.eq.s32.totalorder %s25, 1
      %p95 = por %p93, %p94
      %p97 = scmp.ne.s32.totalorder %s82, %s96
      %p98 = scmp.eq.s32.totalorder %s25, 0
      %p99 = por %p97, %p98
      %s101 = sadd.s32 %s100, 1
      %p104 = scmp.eq.s32.totalorder %s19, 1
      %p105 = scmp.ne.s32.totalorder %s100, %s102
      %p106 = scmp.eq.s32.totalorder %s19, 0
      %p107 = por %p105, %p106
      %p108 = scmp.ne.s32.totalorder %s100, %s102
      %p109 = scmp.eq.s32.totalorder %s24, 1
      %p110 = por %p108, %p109
      %p111 = scmp.ne.s32.totalorder %s102, %s103
      %p112 = scmp.eq.s32.totalorder %s24, 0
      %p113 = por %p111, %p112
      %p114 = scmp.ne.s32.totalorder %s102, %s103
      %p115 = scmp.eq.s32.totalorder %s25, 1
      %p116 = por %p114, %p115
      %p118 = scmp.ne.s32.totalorder %s103, %s117
      %p119 = scmp.eq.s32.totalorder %s25, 0
      %p120 = por %p118, %p119
      %s122 = sadd.s32 %s121, 1
      %p125 = scmp.eq.s32.totalorder %s19, 1
      %p126 = scmp.ne.s32.totalorder %s121, %s123
      %p127 = scmp.eq.s32.totalorder %s19, 0
      %p128 = por %p126, %p127
      %p129 = scmp.ne.s32.totalorder %s121, %s123
      %p130 = scmp.eq.s32.totalorder %s24, 1
      %p131 = por %p129, %p130
      %p132 = scmp.ne.s32.totalorder %s123, %s124
      %p133 = scmp.eq.s32.totalorder %s24, 0
      %p134 = por %p132, %p133
      %p135 = scmp.ne.s32.totalorder %s123, %s124
      %p136 = scmp.eq.s32.totalorder %s25, 1
      %p137 = por %p135, %p136
      %p139 = scmp.ne.s32.totalorder %s124, %s138
      %p140 = scmp.eq.s32.totalorder %s25, 0
      %p141 = por %p139, %p140
      %s143 = sadd.s32 %s142, 1
      %p146 = scmp.eq.s32.totalorder %s19, 1
      %p147 = scmp.ne.s32.totalorder %s142, %s144
      %p148 = scmp.eq.s32.totalorder %s19, 0
      %p149 = por %p147, %p148
      %p150 = scmp.ne.s32.totalorder %s142, %s144
      %p151 = scmp.eq.s32.totalorder %s24, 1
      %p152 = por %p150, %p151
      %p153 = scmp.ne.s32.totalorder %s144, %s145
      %p154 = scmp.eq.s32.totalorder %s24, 0
      %p155 = por %p153, %p154
      %p156 = scmp.ne.s32.totalorder %s144, %s145
      %p157 = scmp.eq.s32.totalorder %s25, 1
      %p158 = por %p156, %p157
      %p160 = scmp.ne.s32.totalorder %s145, %s159
      %p161 = scmp.eq.s32.totalorder %s25, 0
      %p162 = por %p160, %p161
      %s164 = sadd.s32 %s163, 1
      %p167 = scmp.eq.s32.totalorder %s19, 1
      %p168 = scmp.ne.s32.totalorder %s163, %s165
      %p169 = scmp.eq.s32.totalorder %s19, 0
      %p170 = por %p168, %p169
      %p171 = scmp.ne.s32.totalorder %s163, %s165
      %p172 = scmp.eq.s32.totalorder %s24, 1
      %p173 = por %p171, %p172
      %p174 = scmp.ne.s32.totalorder %s165, %s166
      %p175 = scmp.eq.s32.totalorder %s24, 0
      %p176 = por %p174, %p175
      %p177 = scmp.ne.s32.totalorder %s165, %s166
      %p178 = scmp.eq.s32.totalorder %s25, 1
      %p179 = por %p177, %p178
      %p181 = scmp.ne.s32.totalorder %s166, %s180
      %p182 = scmp.eq.s32.totalorder %s25, 0
      %p183 = por %p181, %p182
      %s185 = sadd.s32 %s184, 1
      %p188 = scmp.eq.s32.totalorder %s19, 1
      %p189 = scmp.ne.s32.totalorder %s184, %s186
      %p190 = scmp.eq.s32.totalorder %s19, 0
      %p191 = por %p189, %p190
      %p192 = scmp.ne.s32.totalorder %s184, %s186
      %p193 = scmp.eq.s32.totalorder %s24, 1
      %p194 = por %p192, %p193
      %p195 = scmp.ne.s32.totalorder %s186, %s187
      %p196 = scmp.eq.s32.totalorder %s24, 0
      %p197 = por %p195, %p196
      %p198 = scmp.ne.s32.totalorder %s186, %s187
      %p199 = scmp.eq.s32.totalorder %s25, 1
      %p200 = por %p198, %p199
      %p202 = scmp.ne.s32.totalorder %s187, %s201
      %p203 = scmp.eq.s32.totalorder %s25, 0
      %p204 = por %p202, %p203
      %s206 = sadd.s32 %s205, 1
      %p209 = scmp.eq.s32.totalorder %s19, 1
      %p210 = scmp.ne.s32.totalorder %s205, %s207
      %p211 = scmp.eq.s32.totalorder %s19, 0
      %p212 = por %p210, %p211
      %p213 = scmp.ne.s32.totalorder %s205, %s207
      %p214 = scmp.eq.s32.totalorder %s24, 1
      %p215 = por %p213, %p214
      %p216 = scmp.ne.s32.totalorder %s207, %s208
      %p217 = scmp.eq.s32.totalorder %s24, 0
      %p218 = por %p216, %p217
      %p219 = scmp.ne.s32.totalorder %s207, %s208
      %p220 = scmp.eq.s32.totalorder %s25, 1
      %p221 = por %p219, %p220
      %p223 = scmp.ne.s32.totalorder %s208, %s222
      %p224 = scmp.eq.s32.totalorder %s25, 0
      %p225 = por %p223, %p224
      %s226 = ssub.s32 %s19, %s26
      %p227 = scmp.eq.s32.totalorder %s226, 0
      %s229 = sadd.s32 %s228, 1
      %s230 = scalar_select %p227, %s228, %s229
      %p233 = pneg %p227
      %p234 = scmp.eq.s32.totalorder %s19, 1
      %p235 = por %p233, %p234
      %p236 = scmp.ne.s32.totalorder %s228, %s231
      %p237 = scmp.eq.s32.totalorder %s19, 0
      %p238 = por %p236, %p237
      %p239 = scmp.ne.s32.totalorder %s228, %s231
      %p240 = scmp.eq.s32.totalorder %s24, 1
      %p241 = por %p239, %p240
      %p242 = scmp.ne.s32.totalorder %s231, %s232
      %p243 = scmp.eq.s32.totalorder %s24, 0
      %p244 = por %p242, %p243
      %p245 = scmp.ne.s32.totalorder %s231, %s232
      %p246 = scmp.eq.s32.totalorder %s25, 1
      %p247 = por %p245, %p246
      %p249 = scmp.ne.s32.totalorder %s232, %s248
      %p250 = scmp.eq.s32.totalorder %s25, 0
      %p251 = por %p249, %p250
      %p252 = scmp.le.s32.totalorder 1, %s19
      %p253 = scmp.lt.s32.totalorder %s19, 3
      %p254 = pnand %p252, %p253
      %p255 = pneg %p254
      // Predicated region
      $region9: #{tpu_custom_call.1} parent=5 // pred_check
        _
      $region10: #{tpu_custom_call.1} parent=5 // pred_check_branch
        %257 = sbr.rel (%p254) target = $region12
      $region11: #{tpu_custom_call.1} parent=5 // pred_region
        %s258 = ssub.s32 %s19, 1
        // Predicated region
        $region13: #{tpu_custom_call.1} parent=11 // pred_check
          %p259 = pneg %p92
        $region14: #{tpu_custom_call.1} parent=11 // pred_check_branch
          %261 = sbr.rel (%p259) target = $region16
        $region15: #{tpu_custom_call.1} parent=11 // pred_region
          _
        $region16: #{tpu_custom_call.1} parent=11 // pred_fallthru
          _
        // Predicated region
        $region17: #{tpu_custom_call.1} parent=11 // pred_check
          %p262 = pneg %p113
        $region18: #{tpu_custom_call.1} parent=11 // pred_check_branch
          %264 = sbr.rel (%p262) target = $region20
        $region19: #{tpu_custom_call.1} parent=11 // pred_region
          _
        $region20: #{tpu_custom_call.1} parent=11 // pred_fallthru
          _
        // Predicated region
        $region21: #{tpu_custom_call.1} parent=11 // pred_check
          %p265 = pneg %p134
        $region22: #{tpu_custom_call.1} parent=11 // pred_check_branch
          %267 = sbr.rel (%p265) target = $region24
        $region23: #{tpu_custom_call.1} parent=11 // pred_region
          _
        $region24: #{tpu_custom_call.1} parent=11 // pred_fallthru
          _
        // Predicated region
        $region25: #{tpu_custom_call.1} parent=11 // pred_check
          %p268 = pneg %p155
        $region26: #{tpu_custom_call.1} parent=11 // pred_check_branch
          %270 = sbr.rel (%p268) target = $region28
        $region27: #{tpu_custom_call.1} parent=11 // pred_region
          _
        $region28: #{tpu_custom_call.1} parent=11 // pred_fallthru
          _
        // Predicated region
        $region29: #{tpu_custom_call.1} parent=11 // pred_check
          %p271 = pneg %p176
        $region30: #{tpu_custom_call.1} parent=11 // pred_check_branch
          %273 = sbr.rel (%p271) target = $region32
        $region31: #{tpu_custom_call.1} parent=11 // pred_region
          _
        $region32: #{tpu_custom_call.1} parent=11 // pred_fallthru
          _
        // Predicated region
        $region33: #{tpu_custom_call.1} parent=11 // pred_check
          %p274 = pneg %p197
        $region34: #{tpu_custom_call.1} parent=11 // pred_check_branch
          %276 = sbr.rel (%p274) target = $region36
        $region35: #{tpu_custom_call.1} parent=11 // pred_region
          %s278 = ssub.s32 512, 512
          %279 = vsyncadd [#allocation3], %s278
          %s280 = sshll.u32 [#allocation2], 4
          %s281 = int_to_ptr.vmem [resolvable:$true] %s280
          %286 = dma.hbm_to_vmem [thread:$0]  %s7, 512, %s281, [#allocation3], 128, 128, 8
        $region36: #{tpu_custom_call.1} parent=11 // pred_fallthru
          _
        // Predicated region
        $region37: #{tpu_custom_call.1} parent=11 // pred_check
          %p287 = pneg %p218
        $region38: #{tpu_custom_call.1} parent=11 // pred_check_branch
          %289 = sbr.rel (%p287) target = $region40
        $region39: #{tpu_custom_call.1} parent=11 // pred_region
          _
        $region40: #{tpu_custom_call.1} parent=11 // pred_fallthru
          _
      $region12: #{tpu_custom_call.1} parent=5 // pred_fallthru
        _
      %p290 = scmp.lt.s32.totalorder %s19, 2
      // Predicated region
      $region41: #{tpu_custom_call.1} parent=5 // pred_check
        %p291 = pneg %p290
      $region42: #{tpu_custom_call.1} parent=5 // pred_check_branch
        %293 = sbr.rel (%p291) target = $region44
      $region43: #{tpu_custom_call.1} parent=5 // pred_region
        // Predicated region
        $region45: #{tpu_custom_call.1} parent=43 // pred_check
          %p294 = pneg %p39
        $region46: #{tpu_custom_call.1} parent=43 // pred_check_branch
          %296 = sbr.rel (%p294) target = $region48
        $region47: #{tpu_custom_call.1} parent=43 // pred_region
          %p297 = scmp.lt.s32.totalorder %s19, 1
          %s298 = scalar_select %p297, %s19, 1
          %s299 = smul.addr %s298, 8
          %s300 = scalar_lea.vmem %s0, %s299
        $region48: #{tpu_custom_call.1} parent=43 // pred_fallthru
          _
        // Predicated region
        $region49: #{tpu_custom_call.1} parent=43 // pred_check
          %p301 = pneg %p65
        $region50: #{tpu_custom_call.1} parent=43 // pred_check_branch
          %303 = sbr.rel (%p301) target = $region52
        $region51: #{tpu_custom_call.1} parent=43 // pred_region
          %p304 = scmp.lt.s32.totalorder %s19, 1
          %s305 = scalar_select %p304, %s19, 1
          %s306 = smul.addr %s305, 8
          %s307 = scalar_lea.vmem %s1, %s306
        $region52: #{tpu_custom_call.1} parent=43 // pred_fallthru
          _
      $region44: #{tpu_custom_call.1} parent=5 // pred_fallthru
        _
      %p308 = scmp.le.s32.totalorder 1, %s19
      %p309 = scmp.lt.s32.totalorder %s19, 3
      %p310 = pnand %p308, %p309
      %p311 = pneg %p310
      // Predicated region
      $region53: #{tpu_custom_call.1} parent=5 // pred_check
        _
      $region54: #{tpu_custom_call.1} parent=5 // pred_check_branch
        %313 = sbr.rel (%p310) target = $region56
      $region55: #{tpu_custom_call.1} parent=5 // pred_region
        %s314 = ssub.s32 %s19, 1
        // Predicated region
        $region57: #{tpu_custom_call.1} parent=55 // pred_check
          %p315 = pneg %p197
        $region58: #{tpu_custom_call.1} parent=55 // pred_check_branch
          %317 = sbr.rel (%p315) target = $region60
        $region59: #{tpu_custom_call.1} parent=55 // pred_region
          %318 = dma.done [#allocation3], 512
        $region60: #{tpu_custom_call.1} parent=55 // pred_fallthru
          _
        %p319 = scmp.lt.s32.totalorder %s24, 1
        %s320 = scalar_select %p319, %s24, 1
        %s321 = smul.addr %s320, 8
        %s322 = scalar_lea.vmem %s0, %s321
        %p323 = pneg %p45
        %p324 = pneg %p42
        %p325 = scmp.lt.s32.totalorder %s24, 1
        %s326 = scalar_select %p325, %s24, 1
        %s327 = smul.addr %s326, 8
        %s328 = scalar_lea.vmem %s1, %s327
        %p329 = pneg %p71
        %p330 = pneg %p68
        %p331 = pneg %p92
        %p332 = pneg %p89
        %p333 = pneg %p113
        %p334 = pneg %p110
        %p335 = pneg %p134
        %p336 = pneg %p131
        %p337 = pneg %p155
        %p338 = pneg %p152
        %p339 = pneg %p176
        %p340 = pneg %p173
        %p341 = pneg %p197
        %p342 = pneg %p194
        %p343 = pneg %p218
        %p344 = pneg %p215
        %p345 = pneg %p244
        %p346 = pneg %p241
        %s347 = sand.u32 %s231, 1
        %s348 = scalar_lea.sflag [#allocation4], %s347
        %s349 = sand.u32 %s231, 1
        %s350 = smul.addr %s349, 8
        %s351 = scalar_lea.vmem [#allocation5], %s350
        %p352 = scmp.lt.s32.totalorder %s24, 1
        %s353 = scalar_select %p352, %s24, 1
        %s354 = smul.addr %s353, 8
        %s355 = scalar_lea.vmem %s0, %s354
        %p356 = scmp.lt.s32.totalorder %s24, 1
        %s357 = scalar_select %p356, %s24, 1
        %s358 = smul.addr %s357, 8
        %s359 = scalar_lea.vmem %s1, %s358
        %v360 = vld [vmem:[%s355] sm:$0xff]
        %v361 = vld [vmem:[%s359] sm:$0xff]
        %v362 = vld [vmem:[%s2] sm:$0xf]
        %v363 = vld [vmem:[%s3] sm:$0xff]
        %vm364 = vcmask 64512
        %v366 = vsel %vm364, %v361, 0
        %368 = vmatprep.subr.mxu0 0.0
        %369 = vmatpush1.msra.mxu0 0.0
        %370 = vmatprep.subr.mxu0 0.0
        %371 = vmatpush1.msra.mxu0 0.0
        %372 = vmatprep.subr.mxu0 0.0
        %373 = vmatpush1.msra.mxu0 0.0
        %374 = vmatprep.subr.mxu0 0.0
        %375 = vmatpush1.msra.mxu0 0.0
        %376 = vmatprep.subr.mxu0 0.0
        %377 = vmatpush1.msra.mxu0 0.0
        %378 = vmatprep.subr.mxu0 0.0
        %379 = vmatpush1.msra.mxu0 0.0
        %380 = vmatprep.subr.mxu0 0.0
        %381 = vmatpush1.msra.mxu0 0.0
        %382 = vmatprep.subr.mxu0 0.0
        %383 = vmatpush1.msra.mxu0 0.0
        %384 = vmatprep.subr.mxu0 0.0
        %385 = vmatpush1.msra.mxu0 0.0
        %386 = vmatprep.subr.mxu0 0.0
        %387 = vmatpush1.msra.mxu0 0.0
        %388 = vmatprep.subr.mxu0 0.0
        %389 = vmatpush1.msra.mxu0 0.0
        %390 = vmatprep.subr.mxu0 0.0
        %391 = vmatpush1.msra.mxu0 0.0
        %392 = vmatprep.subr.mxu0 0.0
        %393 = vmatpush1.msra.mxu0 0.0
        %394 = vmatprep.subr.mxu0 0.0
        %395 = vmatpush1.msra.mxu0 0.0
        %396 = vmatprep.subr.mxu0 0.0
        %397 = vmatpush1.msra.mxu0 0.0
        %398 = vmatprep.subr.mxu0 0.0
        %399 = vmatpush1.msra.mxu0 %v363
        %400 = vmatprep.subr.mxu0 0.0
        %401 = vmatpush2.msra.mxu0 0.0
        %402 = vmatprep.subr.mxu0 0.0
        %403 = vmatpush2.msra.mxu0 0.0
        %404 = vmatprep.subr.mxu0 0.0
        %405 = vmatpush2.msra.mxu0 0.0
        %406 = vmatprep.subr.mxu0 0.0
        %407 = vmatpush2.msra.mxu0 0.0
        %408 = vmatprep.subr.mxu0 0.0
        %409 = vmatpush2.msra.mxu0 0.0
        %410 = vmatprep.subr.mxu0 0.0
        %411 = vmatpush2.msra.mxu0 0.0
        %412 = vmatprep.subr.mxu0 0.0
        %413 = vmatpush2.msra.mxu0 0.0
        %414 = vmatprep.subr.mxu0 0.0
        %415 = vmatpush2.msra.mxu0 0.0
        %416 = vmatprep.subr.mxu0 0.0
        %417 = vmatpush2.msra.mxu0 0.0
        %418 = vmatprep.subr.mxu0 0.0
        %419 = vmatpush2.msra.mxu0 0.0
        %420 = vmatprep.subr.mxu0 0.0
        %421 = vmatpush2.msra.mxu0 0.0
        %422 = vmatprep.subr.mxu0 0.0
        %423 = vmatpush2.msra.mxu0 0.0
        %424 = vmatprep.subr.mxu0 0.0
        %425 = vmatpush2.msra.mxu0 0.0
        %426 = vmatprep.subr.mxu0 0.0
        %427 = vmatpush2.msra.mxu0 0.0
        %428 = vmatprep.subr.mxu0 0.0
        %429 = vmatpush2.msra.mxu0 0.0
        %430 = vmatprep.subr.mxu0 0.0
        %431 = vmatpush2.msra.mxu0 0.0
        %432 = vmatprep.mubr.f32.mxu0 0.0
        %433 = vmatmul.mubr.f32.gmra.mxu0 %v366
        %v434 = vpop.f32.mrf.mxu0
        %v435 = vadd.f32 0.0, %v434
        %v436 = vpop.f32.mrf.mxu0
        %437 = vdwg.mxu0
        %vm438 = vcmask 31744
        %v440 = vsel %vm438, %v360, 0
        %vm442 = vcmask 1043456
        %v444 = vsel %vm442, %v362, 0
        %446 = vmatprep.subr.mxu0 0.0
        %447 = vmatpush1.msra.mxu0 0.0
        %448 = vmatprep.subr.mxu0 0.0
        %449 = vmatpush1.msra.mxu0 0.0
        %450 = vmatprep.subr.mxu0 0.0
        %451 = vmatpush1.msra.mxu0 0.0
        %452 = vmatprep.subr.mxu0 0.0
        %453 = vmatpush1.msra.mxu0 0.0
        %454 = vmatprep.subr.mxu0 0.0
        %455 = vmatpush1.msra.mxu0 0.0
        %456 = vmatprep.subr.mxu0 0.0
        %457 = vmatpush1.msra.mxu0 0.0
        %458 = vmatprep.subr.mxu0 0.0
        %459 = vmatpush1.msra.mxu0 0.0
        %460 = vmatprep.subr.mxu0 0.0
        %461 = vmatpush1.msra.mxu0 0.0
        %462 = vmatprep.subr.mxu0 0.0
        %463 = vmatpush1.msra.mxu0 0.0
        %464 = vmatprep.subr.mxu0 0.0
        %465 = vmatpush1.msra.mxu0 0.0
        %466 = vmatprep.subr.mxu0 0.0
        %467 = vmatpush1.msra.mxu0 0.0
        %468 = vmatprep.subr.mxu0 0.0
        %469 = vmatpush1.msra.mxu0 0.0
        %470 = vmatprep.subr.mxu0 0.0
        %471 = vmatpush1.msra.mxu0 0.0
        %472 = vmatprep.subr.mxu0 0.0
        %473 = vmatpush1.msra.mxu0 0.0
        %474 = vmatprep.subr.mxu0 0.0
        %475 = vmatpush1.msra.mxu0 0.0
        %476 = vmatprep.subr.mxu0 0.0
        %477 = vmatpush1.msra.mxu0 %v444
        %478 = vmatprep.subr.mxu0 0.0
        %479 = vmatpush2.msra.mxu0 0.0
        %480 = vmatprep.subr.mxu0 0.0
        %481 = vmatpush2.msra.mxu0 0.0
        %482 = vmatprep.subr.mxu0 0.0
        %483 = vmatpush2.msra.mxu0 0.0
        %484 = vmatprep.subr.mxu0 0.0
        %485 = vmatpush2.msra.mxu0 0.0
        %486 = vmatprep.subr.mxu0 0.0
        %487 = vmatpush2.msra.mxu0 0.0
        %488 = vmatprep.subr.mxu0 0.0
        %489 = vmatpush2.msra.mxu0 0.0
        %490 = vmatprep.subr.mxu0 0.0
        %491 = vmatpush2.msra.mxu0 0.0
        %492 = vmatprep.subr.mxu0 0.0
        %493 = vmatpush2.msra.mxu0 0.0
        %494 = vmatprep.subr.mxu0 0.0
        %495 = vmatpush2.msra.mxu0 0.0
        %496 = vmatprep.subr.mxu0 0.0
        %497 = vmatpush2.msra.mxu0 0.0
        %498 = vmatprep.subr.mxu0 0.0
        %499 = vmatpush2.msra.mxu0 0.0
        %500 = vmatprep.subr.mxu0 0.0
        %501 = vmatpush2.msra.mxu0 0.0
        %502 = vmatprep.subr.mxu0 0.0
        %503 = vmatpush2.msra.mxu0 0.0
        %504 = vmatprep.subr.mxu0 0.0
        %505 = vmatpush2.msra.mxu0 0.0
        %506 = vmatprep.subr.mxu0 0.0
        %507 = vmatpush2.msra.mxu0 0.0
        %508 = vmatprep.subr.mxu0 0.0
        %509 = vmatpush2.msra.mxu0 0.0
        %510 = vmatprep.mubr.f32.mxu0 0.0
        %511 = vmatmul.mubr.f32.gmra.mxu0 %v440
        %v512 = vpop.f32.mrf.mxu0
        %v513 = vadd.f32 %v435, %v512
        %v514 = vpop.f32.mrf.mxu0
        %515 = vdwg.mxu0
        %v516 = vld [vmem:[%s4] sm:$0x1]
        %v518 = vlaneseq
        %v519 = vshrl.u32 %v518, 7
        %v520 = vsub.s32 0, %v519
        %v521 = vrot.slane %v516, %v520
        %v523 = vadd.f32 %v513, %v521
        %v524 = vmax.f32 %v523, 0.0
        %v525 = vld [vmem:[%s5] sm:$0xff]
        %v526 = vld [vmem:[%s5 + $0x8] sm:$0xff]
        %v527 = vld [vmem:[%s5 + $0x10] sm:$0xff]
        %v528 = vld [vmem:[%s5 + $0x18] sm:$0xff]
        %v529 = vld [vmem:[%s6] sm:$0x1]
        %v531 = vlaneseq
        %v532 = vshrl.u32 %v531, 7
        %v533 = vsub.s32 0, %v532
        %v534 = vrot.slane %v529, %v533
        %vm536 = vcmask 261120
        %v538 = vsel %vm536, %v524, 0
        %540 = vmatprep.subr.mxu0 0.0
        %541 = vmatpush1.msra.mxu0 0.0
        %542 = vmatprep.subr.mxu0 0.0
        %543 = vmatpush1.msra.mxu0 0.0
        %544 = vmatprep.subr.mxu0 0.0
        %545 = vmatpush1.msra.mxu0 0.0
        %546 = vmatprep.subr.mxu0 0.0
        %547 = vmatpush1.msra.mxu0 0.0
        %548 = vmatprep.subr.mxu0 0.0
        %549 = vmatpush1.msra.mxu0 0.0
        %550 = vmatprep.subr.mxu0 0.0
        %551 = vmatpush1.msra.mxu0 0.0
        %552 = vmatprep.subr.mxu0 0.0
        %553 = vmatpush1.msra.mxu0 0.0
        %554 = vmatprep.subr.mxu0 0.0
        %555 = vmatpush1.msra.mxu0 0.0
        %556 = vmatprep.subr.mxu0 0.0
        %557 = vmatpush1.msra.mxu0 0.0
        %558 = vmatprep.subr.mxu0 0.0
        %559 = vmatpush1.msra.mxu0 0.0
        %560 = vmatprep.subr.mxu0 0.0
        %561 = vmatpush1.msra.mxu0 0.0
        %562 = vmatprep.subr.mxu0 0.0
        %563 = vmatpush1.msra.mxu0 0.0
        %564 = vmatprep.subr.mxu0 0.0
        %565 = vmatpush1.msra.mxu0 %v528
        %566 = vmatprep.subr.mxu0 0.0
        %567 = vmatpush1.msra.mxu0 %v527
        %568 = vmatprep.subr.mxu0 0.0
        %569 = vmatpush1.msra.mxu0 %v526
        %570 = vmatprep.subr.mxu0 0.0
        %571 = vmatpush1.msra.mxu0 %v525
        %572 = vmatprep.subr.mxu0 0.0
        %573 = vmatpush2.msra.mxu0 0.0
        %574 = vmatprep.subr.mxu0 0.0
        %575 = vmatpush2.msra.mxu0 0.0
        %576 = vmatprep.subr.mxu0 0.0
        %577 = vmatpush2.msra.mxu0 0.0
        %578 = vmatprep.subr.mxu0 0.0
        %579 = vmatpush2.msra.mxu0 0.0
        %580 = vmatprep.subr.mxu0 0.0
        %581 = vmatpush2.msra.mxu0 0.0
        %582 = vmatprep.subr.mxu0 0.0
        %583 = vmatpush2.msra.mxu0 0.0
        %584 = vmatprep.subr.mxu0 0.0
        %585 = vmatpush2.msra.mxu0 0.0
        %586 = vmatprep.subr.mxu0 0.0
        %587 = vmatpush2.msra.mxu0 0.0
        %588 = vmatprep.subr.mxu0 0.0
        %589 = vmatpush2.msra.mxu0 0.0
        %590 = vmatprep.subr.mxu0 0.0
        %591 = vmatpush2.msra.mxu0 0.0
        %592 = vmatprep.subr.mxu0 0.0
        %593 = vmatpush2.msra.mxu0 0.0
        %594 = vmatprep.subr.mxu0 0.0
        %595 = vmatpush2.msra.mxu0 0.0
        %596 = vmatprep.subr.mxu0 0.0
        %597 = vmatpush2.msra.mxu0 0.0
        %598 = vmatprep.subr.mxu0 0.0
        %599 = vmatpush2.msra.mxu0 0.0
        %600 = vmatprep.subr.mxu0 0.0
        %601 = vmatpush2.msra.mxu0 0.0
        %602 = vmatprep.subr.mxu0 0.0
        %603 = vmatpush2.msra.mxu0 0.0
        %604 = vmatprep.mubr.f32.mxu0 0.0
        %605 = vmatmul.mubr.f32.gmra.mxu0 %v538
        %v606 = vpop.f32.mrf.mxu0
        %v607 = vadd.f32 %v534, %v606
        %v608 = vpop.f32.mrf.mxu0
        %609 = vdwg.mxu0
        %v610 = vmax.f32 %v607, 0.0
        %v611 = vld [vmem:[#allocation2] sm:$0xff]
        %v612 = vld [vmem:[#allocation2 + $0x8] sm:$0xff]
        %v613 = vld [vmem:[#allocation2 + $0x10] sm:$0xff]
        %v614 = vld [vmem:[#allocation2 + $0x18] sm:$0xff]
        %v615 = vld [vmem:[%s8] sm:$0x1]
        %v617 = vlaneseq
        %v618 = vshrl.u32 %v617, 7
        %v619 = vsub.s32 0, %v618
        %v620 = vrot.slane %v615, %v619
        %v623 = vsel %vm536, %v610, 0
        %625 = vmatprep.subr.mxu0 0.0
        %626 = vmatpush1.msra.mxu0 0.0
        %627 = vmatprep.subr.mxu0 0.0
        %628 = vmatpush1.msra.mxu0 0.0
        %629 = vmatprep.subr.mxu0 0.0
        %630 = vmatpush1.msra.mxu0 0.0
        %631 = vmatprep.subr.mxu0 0.0
        %632 = vmatpush1.msra.mxu0 0.0
        %633 = vmatprep.subr.mxu0 0.0
        %634 = vmatpush1.msra.mxu0 0.0
        %635 = vmatprep.subr.mxu0 0.0
        %636 = vmatpush1.msra.mxu0 0.0
        %637 = vmatprep.subr.mxu0 0.0
        %638 = vmatpush1.msra.mxu0 0.0
        %639 = vmatprep.subr.mxu0 0.0
        %640 = vmatpush1.msra.mxu0 0.0
        %641 = vmatprep.subr.mxu0 0.0
        %642 = vmatpush1.msra.mxu0 0.0
        %643 = vmatprep.subr.mxu0 0.0
        %644 = vmatpush1.msra.mxu0 0.0
        %645 = vmatprep.subr.mxu0 0.0
        %646 = vmatpush1.msra.mxu0 0.0
        %647 = vmatprep.subr.mxu0 0.0
        %648 = vmatpush1.msra.mxu0 0.0
        %649 = vmatprep.subr.mxu0 0.0
        %650 = vmatpush1.msra.mxu0 %v614
        %651 = vmatprep.subr.mxu0 0.0
        %652 = vmatpush1.msra.mxu0 %v613
        %653 = vmatprep.subr.mxu0 0.0
        %654 = vmatpush1.msra.mxu0 %v612
        %655 = vmatprep.subr.mxu0 0.0
        %656 = vmatpush1.msra.mxu0 %v611
        %657 = vmatprep.subr.mxu0 0.0
        %658 = vmatpush2.msra.mxu0 0.0
        %659 = vmatprep.subr.mxu0 0.0
        %660 = vmatpush2.msra.mxu0 0.0
        %661 = vmatprep.subr.mxu0 0.0
        %662 = vmatpush2.msra.mxu0 0.0
        %663 = vmatprep.subr.mxu0 0.0
        %664 = vmatpush2.msra.mxu0 0.0
        %665 = vmatprep.subr.mxu0 0.0
        %666 = vmatpush2.msra.mxu0 0.0
        %667 = vmatprep.subr.mxu0 0.0
        %668 = vmatpush2.msra.mxu0 0.0
        %669 = vmatprep.subr.mxu0 0.0
        %670 = vmatpush2.msra.mxu0 0.0
        %671 = vmatprep.subr.mxu0 0.0
        %672 = vmatpush2.msra.mxu0 0.0
        %673 = vmatprep.subr.mxu0 0.0
        %674 = vmatpush2.msra.mxu0 0.0
        %675 = vmatprep.subr.mxu0 0.0
        %676 = vmatpush2.msra.mxu0 0.0
        %677 = vmatprep.subr.mxu0 0.0
        %678 = vmatpush2.msra.mxu0 0.0
        %679 = vmatprep.subr.mxu0 0.0
        %680 = vmatpush2.msra.mxu0 0.0
        %681 = vmatprep.subr.mxu0 0.0
        %682 = vmatpush2.msra.mxu0 0.0
        %683 = vmatprep.subr.mxu0 0.0
        %684 = vmatpush2.msra.mxu0 0.0
        %685 = vmatprep.subr.mxu0 0.0
        %686 = vmatpush2.msra.mxu0 0.0
        %687 = vmatprep.subr.mxu0 0.0
        %688 = vmatpush2.msra.mxu0 0.0
        %689 = vmatprep.mubr.f32.mxu0 0.0
        %690 = vmatmul.mubr.f32.gmra.mxu0 %v623
        %v691 = vpop.f32.mrf.mxu0
        %v692 = vadd.f32 %v620, %v691
        %v693 = vpop.f32.mrf.mxu0
        %694 = vdwg.mxu0
        %695 = vst [vmem:[%s351] sm:$0xff] %v692
        %s696 = sand.u32 %s231, 1
        %s697 = scalar_lea.sflag [#allocation4], %s696
        %s698 = sand.u32 %s231, 1
        %s699 = smul.addr %s698, 8
        %s700 = scalar_lea.vmem [#allocation5], %s699
        // Predicated region
        $region61: #{tpu_custom_call.1} parent=55 // pred_check
          %p701 = pneg %p241
        $region62: #{tpu_custom_call.1} parent=55 // pred_check_branch
          %703 = sbr.rel (%p701) target = $region64
        $region63: #{tpu_custom_call.1} parent=55 // pred_region
          %s705 = ssub.s32 128, 128
          %706 = vsyncadd %s697, %s705
          %s707 = smul.addr %s24, 128
          %s708 = scalar_lea.hbm %s9, %s707
          %s710 = sshll.u32 %s700, 4
          %s711 = int_to_ptr.vmem [resolvable:$true] %s710
          %713 = dma.vmem_to_hbm [thread:$0]  %s711, 128, %s708, %s697
        $region64: #{tpu_custom_call.1} parent=55 // pred_fallthru
          _
      $region56: #{tpu_custom_call.1} parent=5 // pred_fallthru
        _
      %p714 = scmp.le.s32.totalorder 2, %s19
      // Predicated region
      $region65: #{tpu_custom_call.1} parent=5 // pred_check
        %p715 = pneg %p714
      $region66: #{tpu_custom_call.1} parent=5 // pred_check_branch
        %717 = sbr.rel (%p715) target = $region68
      $region67: #{tpu_custom_call.1} parent=5 // pred_region
        %s718 = ssub.s32 %s19, 2
        // Predicated region
        $region69: #{tpu_custom_call.1} parent=67 // pred_check
          %p719 = pneg %p247
        $region70: #{tpu_custom_call.1} parent=67 // pred_check_branch
          %721 = sbr.rel (%p719) target = $region72
        $region71: #{tpu_custom_call.1} parent=67 // pred_region
          %s722 = sand.u32 %s232, 1
          %s723 = scalar_lea.sflag [#allocation4], %s722
          %s724 = sand.u32 %s232, 1
          %s725 = smul.addr %s724, 8
          %s726 = scalar_lea.vmem [#allocation5], %s725
          %727 = dma.done %s723, 128
        $region72: #{tpu_custom_call.1} parent=67 // pred_fallthru
          _
      $region68: #{tpu_custom_call.1} parent=5 // pred_fallthru
        _
    $region6: #{tpu_custom_call.1} parent=1 // loop_footer
      %s23 = sadd.s32 1, %s19
    $region7: #{tpu_custom_call.1} parent=1 // loop_footer_branch
      %18 = sbr.rel target = $region3
    $region8: #{tpu_custom_call.1} parent=1 // loop_exit
      _
    %728 = vsyncpa [#allocation3], 1
    %s729 = scalar_lea.sflag [#allocation3], 1
    %730 = vsyncpa %s729, 1
    %731 = vsyncpa [#allocation4], 1
    %s732 = scalar_lea.sflag [#allocation4], 1
    %733 = vsyncpa %s732, 1

</llo_original>
